<compile_context>
chip_gen: v7x
topology: tpu7x:2x2x1
jax: 0.10.0
libtpu: 0.0.40
codegen_flags: <defaults>
</compile_context>

<pallas_src>
import functools

import jax
import jax.numpy as jnp
import numpy as np
from jax.experimental import pallas as pl
from jax.experimental.pallas import tpu as pltpu

_LANE = 128
_CHUNK_TARGET_BYTES = 48 * 1024   # ~12 f32 vregs of working copy per lane chunk

_GEN_PARAMS = {
    # tile_bytes: target input-tile size; vmem_cap: vmem_limit_bytes ceiling;
    # min_steps: minimum parallel grid steps to aim for (megacore only on v7x).
    "v5e":     dict(tile_bytes=2 << 20, vmem_cap=32 << 20, min_steps=1),
    "v6e":     dict(tile_bytes=6 << 20, vmem_cap=64 << 20, min_steps=1),
    "v7x":     dict(tile_bytes=3 << 20, vmem_cap=40 << 20, min_steps=4),
    "unknown": dict(tile_bytes=2 << 20, vmem_cap=32 << 20, min_steps=1),
}


def _tpu_generation():
    try:
        kind = jax.devices()[0].device_kind.lower()
    except Exception:
        return "unknown"
    if "v7" in kind:
        return "v7x"
    if "v6" in kind:
        return "v6e"
    if "v5" in kind:
        return "v5e"
    return "unknown"


def _topk_kernel(x_ref, o_ref, *, k, largest, chunk, compute_dtype):
    """x_ref: (C, tn) tile  (top-k axis on sublanes, flattened batch on lanes).
       o_ref: (k, tn) tile.
       The tile is processed in static lane chunks so the k-step extraction
       loop stays resident in vregs instead of re-streaming VMEM k times."""
    C, tn = x_ref.shape
    is_float = jnp.issubdtype(compute_dtype, jnp.floating)
    if is_float:
        sentinel = jnp.array(-jnp.inf if largest else jnp.inf, compute_dtype)
    else:
        info = jnp.iinfo(compute_dtype)
        sentinel = jnp.array(info.min if largest else info.max, compute_dtype)

    for c0 in range(0, tn, chunk):                       # static python loop
        cn = min(chunk, tn - c0)
        vals = x_ref[:, pl.ds(c0, cn)].astype(compute_dtype)     # (C, cn), in vregs
        if k > 1:
            row = jax.lax.broadcasted_iota(jnp.int32, (C, cn), 0)
        rows = []
        # TODO(synk): for k >= ~8 switch to a per-lane running top-k insert so
        # `vals` is reduced once instead of k full re-reductions.
        for i in range(k):                               # k is small & static
            m = (jnp.max(vals, axis=0, keepdims=True) if largest
                 else jnp.min(vals, axis=0, keepdims=True))      # (1, cn)
            rows.append(m)
            if i + 1 < k:
                hit = vals == m
                if is_float:
                    # NaN-aware: a NaN extremum must still be masked exactly once.
                    hit = hit | (jnp.isnan(vals) & jnp.isnan(m))
                first = jnp.min(jnp.where(hit, row, C), axis=0, keepdims=True)
                vals = jnp.where(row == first, sentinel, vals)
        out = jnp.concatenate(rows, axis=0) if k > 1 else rows[0]
        o_ref[:, pl.ds(c0, cn)] = out.astype(o_ref.dtype)        # one store per chunk


def topk_values(x, k, largest=True, dim=1, tile_lanes=None):
    """Pallas implementation of torch.topk(x, k, dim=dim, largest=largest).values.

    tile_lanes: optional override of the lane-tile size (testing / tuning);
    must be a multiple of 128 when smaller than the flattened batch size."""
    k = int(k)
    dim = dim % x.ndim
    gen = _tpu_generation()
    params = _GEN_PARAMS[gen]

    # --- glue: move the top-k axis to the FRONT and flatten the rest --------
    # TODO(synk): for dim == last, add a lane-resident variant (cross-lane XLU
    # reduce / per-tile pltpu.einshape) to avoid this wrapper HBM transpose.
    x_moved = jnp.moveaxis(x, dim, 0)
    C = x_moved.shape[0]
    lead_shape = x_moved.shape[1:]
    N = int(np.prod(lead_shape)) if lead_shape else 1
    x2 = x_moved.reshape(C, N)

    if not (1 <= k <= C):
        raise ValueError(f"k={k} must satisfy 1 <= k <= {C} (size of dim {dim})")

    # --- compute dtype --------------------------------------------------------
    in_dtype = jnp.dtype(x.dtype)
    if jnp.issubdtype(in_dtype, jnp.floating):
        # v5e has no bf16 VPU path: one upfront upcast beats emulated bf16 ops.
        compute_dtype = (jnp.dtype(jnp.float32)
                         if (gen == "v5e" and in_dtype == jnp.bfloat16) else in_dtype)
    elif jnp.issubdtype(in_dtype, jnp.unsignedinteger):
        compute_dtype = in_dtype if in_dtype.itemsize >= 4 else jnp.dtype(jnp.uint32)
    elif jnp.issubdtype(in_dtype, jnp.integer):
        compute_dtype = in_dtype if in_dtype.itemsize >= 4 else jnp.dtype(jnp.int32)
    else:
        compute_dtype = jnp.dtype(jnp.float32)

    # --- tile selection (no padding; the last grid block may be partial) -----
    # TODO(synk): for very large C (C*128*itemsize beyond the tile budget) add a
    # second "arbitrary" grid axis over C with a running top-k accumulator.
    itemsize = in_dtype.itemsize
    if tile_lanes is not None:
        tn = min(int(tile_lanes), N)
        if tn < N and tn % _LANE:
            raise ValueError("tile_lanes must be a multiple of 128")
    else:
        tn_budget = max(_LANE,
                        (params["tile_bytes"] // max(C * itemsize, 1)) // _LANE * _LANE)
        if N <= tn_budget:
            tn = N          # single block; block dim == array dim is always legal
        else:
            tn = tn_budget  # multiple of 128; partial last block is fine
        if params["min_steps"] > 1 and N >= params["min_steps"] * _LANE:
            # v7x only: give both TensorCores work (and room to pipeline).
            per_step = -(-N // params["min_steps"])
            tn = max(_LANE, min(tn, -(-per_step // _LANE) * _LANE))
    grid = (pl.cdiv(N, tn),)

    # in-kernel lane-chunk size: keep the per-chunk working copy to ~a dozen vregs
    comp_item = jnp.dtype(compute_dtype).itemsize
    chunk = max(_LANE, min(1024,
                           (_CHUNK_TARGET_BYTES // max(C * comp_item, 1)) // _LANE * _LANE))

    # VMEM budget: double-buffered in/out tiles + compiler-scratch slack
    need = 2 * C * tn * itemsize + 2 * k * tn * itemsize + (4 << 20)
    vmem_limit = int(min(params["vmem_cap"], max(need, 16 << 20)))

    out2 = pl.pallas_call(
        functools.partial(_topk_kernel, k=k, largest=bool(largest),
                          chunk=chunk, compute_dtype=compute_dtype),
        out_shape=jax.ShapeDtypeStruct((k, N), x.dtype),
        grid_spec=pltpu.PrefetchScalarGridSpec(
            num_scalar_prefetch=0,
            grid=grid,
            in_specs=[pl.BlockSpec((C, tn), lambda i: (0, i))],
            out_specs=pl.BlockSpec((k, tn), lambda i: (0, i)),
        ),
        compiler_params=pltpu.CompilerParams(
            dimension_semantics=("parallel",),
            vmem_limit_bytes=vmem_limit,
        ),
    )(x2)

    out = out2.reshape((k,) + lead_shape)
    return jnp.moveaxis(out, 0, dim)


if __name__ == "__main__":
    # Module config (the torch module's registered buffers)
    k, largest, dim = 4, True, 1

    key = jax.random.PRNGKey(0)
    # Small NCHW input, top-k over channels (dim=1)
    x = jax.random.normal(key, (2, 16, 8, 8), dtype=jnp.float32)

    y = jax.block_until_ready(topk_values(x, k, largest=largest, dim=dim))
    ref = jnp.moveaxis(jax.lax.top_k(jnp.moveaxis(x, dim, -1), k)[0], -1, dim)
    assert y.shape == (2, k, 8, 8), y.shape
    np.testing.assert_allclose(np.asarray(y), np.asarray(ref), rtol=0, atol=0)

    # largest=False over the last dim
    y2 = jax.block_until_ready(topk_values(x, 3, largest=False, dim=3))
    ref2 = -jax.lax.top_k(-x, 3)[0]
    assert y2.shape == (2, 16, 8, 3), y2.shape
    np.testing.assert_allclose(np.asarray(y2), np.asarray(ref2), rtol=0, atol=0)

    # multi-block grid with a PARTIAL last block (no-pad path): N = 2*20*20 = 800
    xb = jax.random.normal(jax.random.PRNGKey(1), (2, 16, 20, 20), dtype=jnp.float32)
    y3 = jax.block_until_ready(topk_values(xb, k, largest=True, dim=1, tile_lanes=256))
    ref3 = jnp.moveaxis(jax.lax.top_k(jnp.moveaxis(xb, 1, -1), k)[0], -1, 1)
    np.testing.assert_allclose(np.asarray(y3), np.asarray(ref3), rtol=0, atol=0)

    # single big block -> exercises the in-kernel multi-chunk path (768 + 32 lanes)
    y4 = jax.block_until_ready(topk_values(xb, k, largest=True, dim=1))
    np.testing.assert_allclose(np.asarray(y4), np.asarray(ref3), rtol=0, atol=0)

    # integer compute path (no f32 round-trip)
    xi = jax.random.randint(jax.random.PRNGKey(2), (2, 16, 8, 8),
                            -1_000_000, 1_000_000, dtype=jnp.int32)
    y5 = jax.block_until_ready(topk_values(xi, k, largest=True, dim=1))
    ref5 = jnp.moveaxis(jax.lax.top_k(jnp.moveaxis(xi, 1, -1), k)[0], -1, 1)
    np.testing.assert_array_equal(np.asarray(y5), np.asarray(ref5))

    print("KERNEL_OK")
</pallas_src>

<mosaic_0001>
module attributes {stable_mosaic.version = 11 : i64} {
  func.func @_topk_kernel(%arg0: i32, %arg1: memref<16x128xf32, #tpu.memory_space<vmem>>, %arg2: memref<4x128xf32, #tpu.memory_space<vmem>>) attributes {dimension_semantics = [#tpu.dimension_semantics<parallel>], iteration_bounds = array<i64: 1>, scalar_prefetch = 0 : i64, scratch_operands = 0 : i64, tpu.core_type = #tpu.core_type<tc>, window_params = [{transform_indices = @transform_0, window_bounds = array<i64: 16, 128>}, {transform_indices = @transform_1, window_bounds = array<i64: 4, 128>}]} {
    %c0 = arith.constant 0 : index
    %c0_0 = arith.constant 0 : index
    %0 = vector.load %arg1[%c0, %c0_0] : memref<16x128xf32, #tpu.memory_space<vmem>>, vector<16x128xf32>
    %1 = tpu.iota {dimensions = array<i32: 0>} : vector<16x128xi32>
    %cst = arith.constant dense<0xFF800000> : vector<128xf32>
    %2 = vector.multi_reduction <maximumf>, %0, %cst [0] : vector<16x128xf32> to vector<128xf32>
    %3 = vector.shape_cast %2 : vector<128xf32> to vector<1x128xf32>
    %4 = vector.broadcast %3 : vector<1x128xf32> to vector<16x128xf32>
    %5 = arith.cmpf oeq, %0, %4 : vector<16x128xf32>
    %6 = arith.cmpf one, %0, %0 : vector<16x128xf32>
    %7 = arith.cmpf one, %3, %3 : vector<1x128xf32>
    %8 = vector.broadcast %7 : vector<1x128xi1> to vector<16x128xi1>
    %9 = arith.andi %6, %8 : vector<16x128xi1>
    %10 = arith.ori %5, %9 : vector<16x128xi1>
    %c16_i32 = arith.constant 16 : i32
    %11 = vector.broadcast %c16_i32 : i32 to vector<16x128xi32>
    %12 = arith.select %10, %1, %11 : vector<16x128xi1>, vector<16x128xi32>
    %cst_1 = arith.constant dense<2147483647> : vector<128xi32>
    %13 = vector.multi_reduction <minsi>, %12, %cst_1 [0] : vector<16x128xi32> to vector<128xi32>
    %14 = vector.shape_cast %13 : vector<128xi32> to vector<1x128xi32>
    %15 = vector.broadcast %14 : vector<1x128xi32> to vector<16x128xi32>
    %16 = arith.cmpi eq, %1, %15 : vector<16x128xi32>
    %cst_2 = arith.constant 0xFF800000 : f32
    %17 = vector.broadcast %cst_2 : f32 to vector<16x128xf32>
    %18 = arith.select %16, %17, %0 : vector<16x128xi1>, vector<16x128xf32>
    %cst_3 = arith.constant dense<0xFF800000> : vector<128xf32>
    %19 = vector.multi_reduction <maximumf>, %18, %cst_3 [0] : vector<16x128xf32> to vector<128xf32>
    %20 = vector.shape_cast %19 : vector<128xf32> to vector<1x128xf32>
    %21 = vector.broadcast %20 : vector<1x128xf32> to vector<16x128xf32>
    %22 = arith.cmpf oeq, %18, %21 : vector<16x128xf32>
    %23 = arith.cmpf one, %18, %18 : vector<16x128xf32>
    %24 = arith.cmpf one, %20, %20 : vector<1x128xf32>
    %25 = vector.broadcast %24 : vector<1x128xi1> to vector<16x128xi1>
    %26 = arith.andi %23, %25 : vector<16x128xi1>
    %27 = arith.ori %22, %26 : vector<16x128xi1>
    %c16_i32_4 = arith.constant 16 : i32
    %28 = vector.broadcast %c16_i32_4 : i32 to vector<16x128xi32>
    %29 = arith.select %27, %1, %28 : vector<16x128xi1>, vector<16x128xi32>
    %cst_5 = arith.constant dense<2147483647> : vector<128xi32>
    %30 = vector.multi_reduction <minsi>, %29, %cst_5 [0] : vector<16x128xi32> to vector<128xi32>
    %31 = vector.shape_cast %30 : vector<128xi32> to vector<1x128xi32>
    %32 = vector.broadcast %31 : vector<1x128xi32> to vector<16x128xi32>
    %33 = arith.cmpi eq, %1, %32 : vector<16x128xi32>
    %cst_6 = arith.constant 0xFF800000 : f32
    %34 = vector.broadcast %cst_6 : f32 to vector<16x128xf32>
    %35 = arith.select %33, %34, %18 : vector<16x128xi1>, vector<16x128xf32>
    %cst_7 = arith.constant dense<0xFF800000> : vector<128xf32>
    %36 = vector.multi_reduction <maximumf>, %35, %cst_7 [0] : vector<16x128xf32> to vector<128xf32>
    %37 = vector.shape_cast %36 : vector<128xf32> to vector<1x128xf32>
    %38 = vector.broadcast %37 : vector<1x128xf32> to vector<16x128xf32>
    %39 = arith.cmpf oeq, %35, %38 : vector<16x128xf32>
    %40 = arith.cmpf one, %35, %35 : vector<16x128xf32>
    %41 = arith.cmpf one, %37, %37 : vector<1x128xf32>
    %42 = vector.broadcast %41 : vector<1x128xi1> to vector<16x128xi1>
    %43 = arith.andi %40, %42 : vector<16x128xi1>
    %44 = arith.ori %39, %43 : vector<16x128xi1>
    %c16_i32_8 = arith.constant 16 : i32
    %45 = vector.broadcast %c16_i32_8 : i32 to vector<16x128xi32>
    %46 = arith.select %44, %1, %45 : vector<16x128xi1>, vector<16x128xi32>
    %cst_9 = arith.constant dense<2147483647> : vector<128xi32>
    %47 = vector.multi_reduction <minsi>, %46, %cst_9 [0] : vector<16x128xi32> to vector<128xi32>
    %48 = vector.shape_cast %47 : vector<128xi32> to vector<1x128xi32>
    %49 = vector.broadcast %48 : vector<1x128xi32> to vector<16x128xi32>
    %50 = arith.cmpi eq, %1, %49 : vector<16x128xi32>
    %cst_10 = arith.constant 0xFF800000 : f32
    %51 = vector.broadcast %cst_10 : f32 to vector<16x128xf32>
    %52 = arith.select %50, %51, %35 : vector<16x128xi1>, vector<16x128xf32>
    %cst_11 = arith.constant dense<0xFF800000> : vector<128xf32>
    %53 = vector.multi_reduction <maximumf>, %52, %cst_11 [0] : vector<16x128xf32> to vector<128xf32>
    %54 = vector.shape_cast %53 : vector<128xf32> to vector<1x128xf32>
    %55 = tpu.concatenate %3, %20, %37, %54 in 0 : vector<1x128xf32>, vector<1x128xf32>, vector<1x128xf32>, vector<1x128xf32> -> vector<4x128xf32>
    %c0_12 = arith.constant 0 : index
    %c0_13 = arith.constant 0 : index
    %56 = vector.load %arg2[%c0_12, %c0_13] : memref<4x128xf32, #tpu.memory_space<vmem>>, vector<4x128xf32>
    tpu.vector_store %arg2[%c0_12, %c0_13], %55 {strides = array<i32>} : memref<4x128xf32, #tpu.memory_space<vmem>>, vector<4x128xf32>,
    return
  }
  func.func @transform_0(%arg0: i32) -> (i32, i32) {
    %c0_i32 = arith.constant 0 : i32
    %c0_i32_0 = arith.constant 0 : i32
    return %c0_i32, %arg0 : i32, i32
  }
  func.func @transform_1(%arg0: i32) -> (i32, i32) {
    %c0_i32 = arith.constant 0 : i32
    %c0_i32_0 = arith.constant 0 : i32
    return %c0_i32, %arg0 : i32, i32
  }
}

</mosaic_0001>

<llo_original>
// kernel: tpu_custom_call.1
$region0: #{tpu_custom_call.1}
  #allocation0 [shape = 'u32[]', space=smem, size = 0x4, offset = 0x4, fixed_abs, tag = 'smem constant byte address 0x4 - core index']
  #allocation1 [shape = 'u32[144,128]{1,0:T(1,128)}', space=vmem, size = 0x12000, scoped, tag = 'internal scratch']
  %s0 = inlined_call_operand.hbm [shape: f32[16,128], index: 0, kind: input, shape index: {}]
  %s1 = inlined_call_operand.hbm [shape: f32[4,128], index: 1, kind: output, shape index: {}]
  %s2 = sld [smem:[#allocation0]]
  $region18: #{tpu_custom_call.1} parent=0
    _
  %s4 = ssub.s32 1, %s2
  %s5 = scalar_select 0, %s4, %s2
  $region1: #{tpu_custom_call.1} parent=0
    #allocation2 [shape = 'u8[8192]{0}', space=vmem, size = 0x2000, scoped, tag = 'input window, operand 0, single buffered']
    #allocation3 [shape = 's32[1]{0}', space=sflag, size = 0x4, scoped, tag = 'scoped memory for tpu_custom_call.1']
    #allocation4 [shape = 's32[1]{0}', space=sflag, size = 0x4, scoped, tag = 'scoped memory for tpu_custom_call.1']
    #allocation5 [shape = 'u8[2048]{0}', space=vmem, size = 0x800, scoped, tag = 'output window, operand 0, single buffered']
    %6 = vsyncpa [#allocation3], 0
    %7 = vsyncpa [#allocation4], 0
    // Predicated region
    $region2: #{tpu_custom_call.1} parent=1 // pred_check
      _
    $region3: #{tpu_custom_call.1} parent=1 // pred_check_branch
      %9 = sbr.rel (0) target = $region5
    $region4: #{tpu_custom_call.1} parent=1 // pred_region
      %s11 = ssub.s32 256, 256
      %12 = vsyncadd [#allocation3], %s11
      %s13 = sshll.u32 [#allocation2], 4
      %s14 = int_to_ptr.vmem [resolvable:$true] %s13
      %19 = dma.hbm_to_vmem [thread:$0]  %s0, 256, %s14, [#allocation3], 128, 128, 8
    $region5: #{tpu_custom_call.1} parent=1 // pred_fallthru
      _
    // Predicated region
    $region6: #{tpu_custom_call.1} parent=1 // pred_check
      _
    $region7: #{tpu_custom_call.1} parent=1 // pred_check_branch
      %21 = sbr.rel (0) target = $region9
    $region8: #{tpu_custom_call.1} parent=1 // pred_region
      %22 = dma.done [#allocation3], 256
    $region9: #{tpu_custom_call.1} parent=1 // pred_fallthru
      _
    %v23 = vld [vmem:[#allocation2] sm:$0xff]
    %v24 = vld [vmem:[#allocation2 + $0x8] sm:$0xff]
    %v25 = vlaneseq
    %v26 = vshrl.u32 %v25, 7
    %v27 = vadd.s32 %v26, 8
    %v28 = vmax.f32 %v23, %v24
    %v29 = vrot.slane %v28, 4
    %v30 = vmax.f32 %v28, %v29
    %v31 = vrot.slane %v30, 2
    %v32 = vmax.f32 %v30, %v31
    %v33 = vrot.slane %v32, 1
    %v34 = vmax.f32 %v32, %v33
    %vm35 = vcmp.eq.f32.partialorder %v23, %v34
    %vm36 = vcmp.eq.f32.partialorder %v24, %v34
    %vm37 = vcmp.ne.f32.partialorder %v23, %v23
    %vm38 = vcmp.ne.f32.partialorder %v24, %v24
    %vm39 = vcmp.ne.f32.partialorder %v34, %v34
    %v40 = vsel %vm39, 1, 0
    %vm41 = vcmp.eq.s32.totalorder %v40, 1
    %vm42 = vmand %vm37, %vm41
    %vm43 = vmand %vm38, %vm41
    %vm44 = vmor %vm35, %vm42
    %vm45 = vmor %vm36, %vm43
    %v46 = vsel %vm44, %v26, 16
    %v47 = vsel %vm45, %v27, 16
    %vm48 = vcmp.lt.s32.totalorder %v46, %v47
    %v49 = vsel %vm48, %v46, %v47
    %v50 = vrot.slane %v49, 4
    %vm51 = vcmp.lt.s32.totalorder %v49, %v50
    %v52 = vsel %vm51, %v49, %v50
    %v53 = vrot.slane %v52, 2
    %vm54 = vcmp.lt.s32.totalorder %v52, %v53
    %v55 = vsel %vm54, %v52, %v53
    %v56 = vrot.slane %v55, 1
    %vm57 = vcmp.lt.s32.totalorder %v55, %v56
    %v58 = vsel %vm57, %v55, %v56
    %vm59 = vcmp.eq.s32.totalorder %v26, %v58
    %vm60 = vcmp.eq.s32.totalorder %v27, %v58
    %v61 = vsel %vm59, -inf, %v23
    %v62 = vsel %vm60, -inf, %v24
    %v63 = vmax.f32 %v61, %v62
    %v64 = vrot.slane %v63, 4
    %v65 = vmax.f32 %v63, %v64
    %v66 = vrot.slane %v65, 2
    %v67 = vmax.f32 %v65, %v66
    %v68 = vrot.slane %v67, 1
    %v69 = vmax.f32 %v67, %v68
    %vm70 = vcmp.eq.f32.partialorder %v61, %v69
    %vm71 = vcmp.eq.f32.partialorder %v62, %v69
    %vm72 = vcmp.ne.f32.partialorder %v61, %v61
    %vm73 = vcmp.ne.f32.partialorder %v62, %v62
    %vm74 = vcmp.ne.f32.partialorder %v69, %v69
    %v75 = vsel %vm74, 1, 0
    %vm76 = vcmp.eq.s32.totalorder %v75, 1
    %vm77 = vmand %vm72, %vm76
    %vm78 = vmand %vm73, %vm76
    %vm79 = vmor %vm70, %vm77
    %vm80 = vmor %vm71, %vm78
    %v81 = vsel %vm79, %v26, 16
    %v82 = vsel %vm80, %v27, 16
    %vm83 = vcmp.lt.s32.totalorder %v81, %v82
    %v84 = vsel %vm83, %v81, %v82
    %v85 = vrot.slane %v84, 4
    %vm86 = vcmp.lt.s32.totalorder %v84, %v85
    %v87 = vsel %vm86, %v84, %v85
    %v88 = vrot.slane %v87, 2
    %vm89 = vcmp.lt.s32.totalorder %v87, %v88
    %v90 = vsel %vm89, %v87, %v88
    %v91 = vrot.slane %v90, 1
    %vm92 = vcmp.lt.s32.totalorder %v90, %v91
    %v93 = vsel %vm92, %v90, %v91
    %vm94 = vcmp.eq.s32.totalorder %v26, %v93
    %vm95 = vcmp.eq.s32.totalorder %v27, %v93
    %v96 = vsel %vm94, -inf, %v61
    %v97 = vsel %vm95, -inf, %v62
    %v98 = vmax.f32 %v96, %v97
    %v99 = vrot.slane %v98, 4
    %v100 = vmax.f32 %v98, %v99
    %v101 = vrot.slane %v100, 2
    %v102 = vmax.f32 %v100, %v101
    %v103 = vrot.slane %v102, 1
    %v104 = vmax.f32 %v102, %v103
    %vm105 = vcmp.eq.f32.partialorder %v96, %v104
    %vm106 = vcmp.eq.f32.partialorder %v97, %v104
    %vm107 = vcmp.ne.f32.partialorder %v96, %v96
    %vm108 = vcmp.ne.f32.partialorder %v97, %v97
    %vm109 = vcmp.ne.f32.partialorder %v104, %v104
    %v110 = vsel %vm109, 1, 0
    %vm111 = vcmp.eq.s32.totalorder %v110, 1
    %vm112 = vmand %vm107, %vm111
    %vm113 = vmand %vm108, %vm111
    %vm114 = vmor %vm105, %vm112
    %vm115 = vmor %vm106, %vm113
    %v116 = vsel %vm114, %v26, 16
    %v117 = vsel %vm115, %v27, 16
    %vm118 = vcmp.lt.s32.totalorder %v116, %v117
    %v119 = vsel %vm118, %v116, %v117
    %v120 = vrot.slane %v119, 4
    %vm121 = vcmp.lt.s32.totalorder %v119, %v120
    %v122 = vsel %vm121, %v119, %v120
    %v123 = vrot.slane %v122, 2
    %vm124 = vcmp.lt.s32.totalorder %v122, %v123
    %v125 = vsel %vm124, %v122, %v123
    %v126 = vrot.slane %v125, 1
    %vm127 = vcmp.lt.s32.totalorder %v125, %v126
    %v128 = vsel %vm127, %v125, %v126
    %vm129 = vcmp.eq.s32.totalorder %v26, %v128
    %vm130 = vcmp.eq.s32.totalorder %v27, %v128
    %v131 = vsel %vm129, -inf, %v96
    %v132 = vsel %vm130, -inf, %v97
    %v133 = vmax.f32 %v131, %v132
    %v134 = vrot.slane %v133, 4
    %v135 = vmax.f32 %v133, %v134
    %v136 = vrot.slane %v135, 2
    %v137 = vmax.f32 %v135, %v136
    %v138 = vrot.slane %v137, 1
    %v139 = vmax.f32 %v137, %v138
    %vm140 = vcmask 1040384
    %v141 = vsel %vm140, %v34, %v69
    %vm142 = vcmask 1041408
    %v143 = vsel %vm142, %v141, %v104
    %vm144 = vcmask 1042432
    %v145 = vsel %vm144, %v143, %v139
    %146 = vst [vmem:[#allocation5] sm:$0xf] %v145
    // Predicated region
    $region10: #{tpu_custom_call.1} parent=1 // pred_check
      _
    $region11: #{tpu_custom_call.1} parent=1 // pred_check_branch
      %148 = sbr.rel (0) target = $region13
    $region12: #{tpu_custom_call.1} parent=1 // pred_region
      %s150 = ssub.s32 64, 64
      %151 = vsyncadd [#allocation4], %s150
      %s153 = sshll.u32 [#allocation5], 4
      %s154 = int_to_ptr.vmem [resolvable:$true] %s153
      %156 = dma.vmem_to_hbm [thread:$0]  %s154, 64, %s1, [#allocation4]
    $region13: #{tpu_custom_call.1} parent=1 // pred_fallthru
      _
    // Predicated region
    $region14: #{tpu_custom_call.1} parent=1 // pred_check
      _
    $region15: #{tpu_custom_call.1} parent=1 // pred_check_branch
      %158 = sbr.rel (0) target = $region17
    $region16: #{tpu_custom_call.1} parent=1 // pred_region
      %159 = dma.done [#allocation4], 64
    $region17: #{tpu_custom_call.1} parent=1 // pred_fallthru
      _
    %160 = vsyncpa [#allocation3], 1
    %161 = vsyncpa [#allocation4], 1

</llo_original>
